<compile_context>
chip_gen: v5e
topology: v5e:2x2
jax: 0.10.0
libtpu: 0.0.40
codegen_flags: <defaults>
</compile_context>

<pallas_src>
import functools

import jax
import jax.numpy as jnp
import numpy as np
from jax.experimental import pallas as pl
from jax.experimental.pallas import tpu as pltpu


def _conv3x3_kernel(x_ref, w_ref, mask_ref, o_ref, *, H, W):
    """3x3 / stride-1 / pad-1 conv for one batch element.

    x_ref   : (1, Cin, H*W)   flat NCHW input (lane dim = H*W)
    w_ref   : (9, Cout, Cin)  per-tap weights, resident across the grid
    mask_ref: (9, 1, H*W)     per-tap validity masks (pad=1 halo zeroing)
    o_ref   : (1, Cout, H*W)  lane-dense output block (NCHW-flat)
    """
    HW = H * W
    cout = o_ref.shape[1]
    x = x_ref[0]                                        # (Cin, HW)

    acc = jnp.zeros((cout, HW), jnp.float32)
    for kh in range(3):
        for kw in range(3):
            tap = kh * 3 + kw
            delta = (kh - 1) * W + (kw - 1)
            if delta == 0:
                shifted = x
            else:
                # shifted[p] = x[(p + delta) mod HW]; the mask zeroes any
                # wrapped / out-of-image pixel, so wraparound is harmless.
                shifted = pltpu.roll(x, (-delta) % HW, 1)
            tap_in = shifted * mask_ref[tap]            # (Cin, HW)
            acc = acc + jnp.dot(
                w_ref[tap], tap_in, preferred_element_type=jnp.float32)
    o_ref[0] = acc.astype(o_ref.dtype)


def tail_forward(x_nchw, weight_oihw):
    """Conv2d(k=3, stride=1, pad=1, bias=False). x: (N,Cin,H,W), w: (Cout,Cin,3,3)."""
    N, Cin, H, W = x_nchw.shape
    Cout = weight_oihw.shape[0]
    HW = H * W

    # ---- free layout glue: contiguous reshape only (no transpose, no pad) ----
    x_flat = x_nchw.reshape(N, Cin, HW)                          # (N, Cin, H*W)
    # pre-pack weights to (9, Cout, Cin): tap index = kh*3 + kw
    w_packed = jnp.transpose(weight_oihw, (2, 3, 0, 1)).reshape(9, Cout, Cin)

    # Tiny constant per-tap validity masks (the pad=1 halo).  9 * H*W floats,
    # resident in VMEM across the grid.
    p = np.arange(HW)
    hh, ww = p // W, p % W
    masks = []
    for kh in range(3):
        for kw in range(3):
            dh, dw = kh - 1, kw - 1
            masks.append(
                (hh + dh >= 0) & (hh + dh < H) & (ww + dw >= 0) & (ww + dw < W)
            )
    mask = jnp.asarray(
        np.stack(masks).reshape(9, 1, HW).astype(np.float32)
    ).astype(x_nchw.dtype)

    out_flat = pl.pallas_call(
        functools.partial(_conv3x3_kernel, H=H, W=W),
        out_shape=jax.ShapeDtypeStruct((N, Cout, HW), x_nchw.dtype),
        grid_spec=pltpu.PrefetchScalarGridSpec(
            num_scalar_prefetch=0,
            grid=(N,),
            in_specs=[
                pl.BlockSpec((1, Cin, HW), lambda n: (n, 0, 0)),
                pl.BlockSpec((9, Cout, Cin), lambda n: (0, 0, 0)),
                pl.BlockSpec((9, 1, HW), lambda n: (0, 0, 0)),
            ],
            out_specs=pl.BlockSpec((1, Cout, HW), lambda n: (n, 0, 0)),
        ),
        compiler_params=pltpu.CompilerParams(
            dimension_semantics=("parallel",),
        ),
    )(x_flat, w_packed, mask)

    # (N, Cout, H*W) -> (N, Cout, H, W): contiguous reshape, already NCHW.
    return out_flat.reshape(N, Cout, H, W)


if __name__ == "__main__":
    # Small shapes consistent with the module's forward (NCHW).
    N, Cin, Cout, H, W = 2, 4, 4, 16, 16

    key = jax.random.PRNGKey(0)
    kx, kw = jax.random.split(key)
    x = jax.random.normal(kx, (N, Cin, H, W), dtype=jnp.float32)
    # Deterministic synthetic weights (same shape as nn.Conv2d weight: OIHW).
    weight = jax.random.normal(kw, (Cout, Cin, 3, 3), dtype=jnp.float32) * 0.1

    out = tail_forward(x, weight)
    out = jax.block_until_ready(out)

    # Correctness check against XLA's conv (NCHW, OIHW, pad=1).
    ref = jax.lax.conv_general_dilated(
        x, weight, window_strides=(1, 1), padding=((1, 1), (1, 1)),
        dimension_numbers=("NCHW", "OIHW", "NCHW"),
    )
    assert out.shape == (N, Cout, H, W)
    assert jnp.allclose(out, ref, atol=1e-4, rtol=1e-4)

    print("KERNEL_OK")
</pallas_src>

<mosaic_0001>
module attributes {stable_mosaic.version = 11 : i64} {
  func.func @_conv3x3_kernel(%arg0: i32, %arg1: memref<1x4x256xf32, #tpu.memory_space<vmem>>, %arg2: memref<9x4x4xf32, #tpu.memory_space<vmem>>, %arg3: memref<9x1x256xf32, #tpu.memory_space<vmem>>, %arg4: memref<1x4x256xf32, #tpu.memory_space<vmem>>) attributes {dimension_semantics = [#tpu.dimension_semantics<parallel>], iteration_bounds = array<i64: 2>, scalar_prefetch = 0 : i64, scratch_operands = 0 : i64, tpu.core_type = #tpu.core_type<tc>, window_params = [{transform_indices = @transform_0, window_bounds = array<i64: 1, 4, 256>}, {pipeline_mode = #tpu.pipeline_mode<synchronous>, transform_indices = @transform_1, window_bounds = array<i64: 9, 4, 4>}, {pipeline_mode = #tpu.pipeline_mode<synchronous>, transform_indices = @transform_2, window_bounds = array<i64: 9, 1, 256>}, {transform_indices = @transform_3, window_bounds = array<i64: 1, 4, 256>}]} {
    %c0 = arith.constant 0 : index
    %c0_0 = arith.constant 0 : index
    %c0_1 = arith.constant 0 : index
    %0 = vector.load %arg1[%c0, %c0_0, %c0_1] : memref<1x4x256xf32, #tpu.memory_space<vmem>>, vector<1x4x256xf32>
    %1 = vector.shape_cast %0 : vector<1x4x256xf32> to vector<4x256xf32>
    %cst = arith.constant 0.000000e+00 : f32
    %2 = vector.broadcast %cst : f32 to vector<4x256xf32>
    %c17_i32 = arith.constant 17 : i32
    %3 = tpu.dynamic_rotate %1 by %c17_i32 dim 1 : vector<4x256xf32>, i32 -> vector<4x256xf32>
    %c0_2 = arith.constant 0 : index
    %c0_3 = arith.constant 0 : index
    %c0_4 = arith.constant 0 : index
    %4 = vector.load %arg3[%c0_2, %c0_3, %c0_4] : memref<9x1x256xf32, #tpu.memory_space<vmem>>, vector<1x1x256xf32>
    %5 = vector.shape_cast %4 : vector<1x1x256xf32> to vector<1x256xf32>
    %6 = vector.broadcast %5 : vector<1x256xf32> to vector<4x256xf32>
    %7 = arith.mulf %3, %6 : vector<4x256xf32>
    %c0_5 = arith.constant 0 : index
    %c0_6 = arith.constant 0 : index
    %c0_7 = arith.constant 0 : index
    %8 = vector.load %arg2[%c0_5, %c0_6, %c0_7] : memref<9x4x4xf32, #tpu.memory_space<vmem>>, vector<1x4x4xf32>
    %9 = vector.shape_cast %8 : vector<1x4x4xf32> to vector<4x4xf32>
    %cst_8 = arith.constant dense<0.000000e+00> : vector<4x256xf32>
    %10 = tpu.matmul %9, %7, %cst_8 {dimension_numbers = #tpu.dot_dimension_numbers<[1], [0], [0], [1], [0, 0, 1, 1], [], []>} : vector<4x4xf32>, vector<4x256xf32>, vector<4x256xf32> -> vector<4x256xf32>
    %11 = arith.addf %2, %10 : vector<4x256xf32>
    %c16_i32 = arith.constant 16 : i32
    %12 = tpu.dynamic_rotate %1 by %c16_i32 dim 1 : vector<4x256xf32>, i32 -> vector<4x256xf32>
    %c1 = arith.constant 1 : index
    %c0_9 = arith.constant 0 : index
    %c0_10 = arith.constant 0 : index
    %13 = vector.load %arg3[%c1, %c0_9, %c0_10] : memref<9x1x256xf32, #tpu.memory_space<vmem>>, vector<1x1x256xf32>
    %14 = vector.shape_cast %13 : vector<1x1x256xf32> to vector<1x256xf32>
    %15 = vector.broadcast %14 : vector<1x256xf32> to vector<4x256xf32>
    %16 = arith.mulf %12, %15 : vector<4x256xf32>
    %c1_11 = arith.constant 1 : index
    %c0_12 = arith.constant 0 : index
    %c0_13 = arith.constant 0 : index
    %17 = vector.load %arg2[%c1_11, %c0_12, %c0_13] : memref<9x4x4xf32, #tpu.memory_space<vmem>>, vector<1x4x4xf32>
    %18 = vector.shape_cast %17 : vector<1x4x4xf32> to vector<4x4xf32>
    %cst_14 = arith.constant dense<0.000000e+00> : vector<4x256xf32>
    %19 = tpu.matmul %18, %16, %cst_14 {dimension_numbers = #tpu.dot_dimension_numbers<[1], [0], [0], [1], [0, 0, 1, 1], [], []>} : vector<4x4xf32>, vector<4x256xf32>, vector<4x256xf32> -> vector<4x256xf32>
    %20 = arith.addf %11, %19 : vector<4x256xf32>
    %c15_i32 = arith.constant 15 : i32
    %21 = tpu.dynamic_rotate %1 by %c15_i32 dim 1 : vector<4x256xf32>, i32 -> vector<4x256xf32>
    %c2 = arith.constant 2 : index
    %c0_15 = arith.constant 0 : index
    %c0_16 = arith.constant 0 : index
    %22 = vector.load %arg3[%c2, %c0_15, %c0_16] : memref<9x1x256xf32, #tpu.memory_space<vmem>>, vector<1x1x256xf32>
    %23 = vector.shape_cast %22 : vector<1x1x256xf32> to vector<1x256xf32>
    %24 = vector.broadcast %23 : vector<1x256xf32> to vector<4x256xf32>
    %25 = arith.mulf %21, %24 : vector<4x256xf32>
    %c2_17 = arith.constant 2 : index
    %c0_18 = arith.constant 0 : index
    %c0_19 = arith.constant 0 : index
    %26 = vector.load %arg2[%c2_17, %c0_18, %c0_19] : memref<9x4x4xf32, #tpu.memory_space<vmem>>, vector<1x4x4xf32>
    %27 = vector.shape_cast %26 : vector<1x4x4xf32> to vector<4x4xf32>
    %cst_20 = arith.constant dense<0.000000e+00> : vector<4x256xf32>
    %28 = tpu.matmul %27, %25, %cst_20 {dimension_numbers = #tpu.dot_dimension_numbers<[1], [0], [0], [1], [0, 0, 1, 1], [], []>} : vector<4x4xf32>, vector<4x256xf32>, vector<4x256xf32> -> vector<4x256xf32>
    %29 = arith.addf %20, %28 : vector<4x256xf32>
    %c1_i32 = arith.constant 1 : i32
    %30 = tpu.dynamic_rotate %1 by %c1_i32 dim 1 : vector<4x256xf32>, i32 -> vector<4x256xf32>
    %c3 = arith.constant 3 : index
    %c0_21 = arith.constant 0 : index
    %c0_22 = arith.constant 0 : index
    %31 = vector.load %arg3[%c3, %c0_21, %c0_22] : memref<9x1x256xf32, #tpu.memory_space<vmem>>, vector<1x1x256xf32>
    %32 = vector.shape_cast %31 : vector<1x1x256xf32> to vector<1x256xf32>
    %33 = vector.broadcast %32 : vector<1x256xf32> to vector<4x256xf32>
    %34 = arith.mulf %30, %33 : vector<4x256xf32>
    %c3_23 = arith.constant 3 : index
    %c0_24 = arith.constant 0 : index
    %c0_25 = arith.constant 0 : index
    %35 = vector.load %arg2[%c3_23, %c0_24, %c0_25] : memref<9x4x4xf32, #tpu.memory_space<vmem>>, vector<1x4x4xf32>
    %36 = vector.shape_cast %35 : vector<1x4x4xf32> to vector<4x4xf32>
    %cst_26 = arith.constant dense<0.000000e+00> : vector<4x256xf32>
    %37 = tpu.matmul %36, %34, %cst_26 {dimension_numbers = #tpu.dot_dimension_numbers<[1], [0], [0], [1], [0, 0, 1, 1], [], []>} : vector<4x4xf32>, vector<4x256xf32>, vector<4x256xf32> -> vector<4x256xf32>
    %38 = arith.addf %29, %37 : vector<4x256xf32>
    %c4 = arith.constant 4 : index
    %c0_27 = arith.constant 0 : index
    %c0_28 = arith.constant 0 : index
    %39 = vector.load %arg3[%c4, %c0_27, %c0_28] : memref<9x1x256xf32, #tpu.memory_space<vmem>>, vector<1x1x256xf32>
    %40 = vector.shape_cast %39 : vector<1x1x256xf32> to vector<1x256xf32>
    %41 = vector.broadcast %40 : vector<1x256xf32> to vector<4x256xf32>
    %42 = arith.mulf %1, %41 : vector<4x256xf32>
    %c4_29 = arith.constant 4 : index
    %c0_30 = arith.constant 0 : index
    %c0_31 = arith.constant 0 : index
    %43 = vector.load %arg2[%c4_29, %c0_30, %c0_31] : memref<9x4x4xf32, #tpu.memory_space<vmem>>, vector<1x4x4xf32>
    %44 = vector.shape_cast %43 : vector<1x4x4xf32> to vector<4x4xf32>
    %cst_32 = arith.constant dense<0.000000e+00> : vector<4x256xf32>
    %45 = tpu.matmul %44, %42, %cst_32 {dimension_numbers = #tpu.dot_dimension_numbers<[1], [0], [0], [1], [0, 0, 1, 1], [], []>} : vector<4x4xf32>, vector<4x256xf32>, vector<4x256xf32> -> vector<4x256xf32>
    %46 = arith.addf %38, %45 : vector<4x256xf32>
    %c255_i32 = arith.constant 255 : i32
    %47 = tpu.dynamic_rotate %1 by %c255_i32 dim 1 : vector<4x256xf32>, i32 -> vector<4x256xf32>
    %c5 = arith.constant 5 : index
    %c0_33 = arith.constant 0 : index
    %c0_34 = arith.constant 0 : index
    %48 = vector.load %arg3[%c5, %c0_33, %c0_34] : memref<9x1x256xf32, #tpu.memory_space<vmem>>, vector<1x1x256xf32>
    %49 = vector.shape_cast %48 : vector<1x1x256xf32> to vector<1x256xf32>
    %50 = vector.broadcast %49 : vector<1x256xf32> to vector<4x256xf32>
    %51 = arith.mulf %47, %50 : vector<4x256xf32>
    %c5_35 = arith.constant 5 : index
    %c0_36 = arith.constant 0 : index
    %c0_37 = arith.constant 0 : index
    %52 = vector.load %arg2[%c5_35, %c0_36, %c0_37] : memref<9x4x4xf32, #tpu.memory_space<vmem>>, vector<1x4x4xf32>
    %53 = vector.shape_cast %52 : vector<1x4x4xf32> to vector<4x4xf32>
    %cst_38 = arith.constant dense<0.000000e+00> : vector<4x256xf32>
    %54 = tpu.matmul %53, %51, %cst_38 {dimension_numbers = #tpu.dot_dimension_numbers<[1], [0], [0], [1], [0, 0, 1, 1], [], []>} : vector<4x4xf32>, vector<4x256xf32>, vector<4x256xf32> -> vector<4x256xf32>
    %55 = arith.addf %46, %54 : vector<4x256xf32>
    %c241_i32 = arith.constant 241 : i32
    %56 = tpu.dynamic_rotate %1 by %c241_i32 dim 1 : vector<4x256xf32>, i32 -> vector<4x256xf32>
    %c6 = arith.constant 6 : index
    %c0_39 = arith.constant 0 : index
    %c0_40 = arith.constant 0 : index
    %57 = vector.load %arg3[%c6, %c0_39, %c0_40] : memref<9x1x256xf32, #tpu.memory_space<vmem>>, vector<1x1x256xf32>
    %58 = vector.shape_cast %57 : vector<1x1x256xf32> to vector<1x256xf32>
    %59 = vector.broadcast %58 : vector<1x256xf32> to vector<4x256xf32>
    %60 = arith.mulf %56, %59 : vector<4x256xf32>
    %c6_41 = arith.constant 6 : index
    %c0_42 = arith.constant 0 : index
    %c0_43 = arith.constant 0 : index
    %61 = vector.load %arg2[%c6_41, %c0_42, %c0_43] : memref<9x4x4xf32, #tpu.memory_space<vmem>>, vector<1x4x4xf32>
    %62 = vector.shape_cast %61 : vector<1x4x4xf32> to vector<4x4xf32>
    %cst_44 = arith.constant dense<0.000000e+00> : vector<4x256xf32>
    %63 = tpu.matmul %62, %60, %cst_44 {dimension_numbers = #tpu.dot_dimension_numbers<[1], [0], [0], [1], [0, 0, 1, 1], [], []>} : vector<4x4xf32>, vector<4x256xf32>, vector<4x256xf32> -> vector<4x256xf32>
    %64 = arith.addf %55, %63 : vector<4x256xf32>
    %c240_i32 = arith.constant 240 : i32
    %65 = tpu.dynamic_rotate %1 by %c240_i32 dim 1 : vector<4x256xf32>, i32 -> vector<4x256xf32>
    %c7 = arith.constant 7 : index
    %c0_45 = arith.constant 0 : index
    %c0_46 = arith.constant 0 : index
    %66 = vector.load %arg3[%c7, %c0_45, %c0_46] : memref<9x1x256xf32, #tpu.memory_space<vmem>>, vector<1x1x256xf32>
    %67 = vector.shape_cast %66 : vector<1x1x256xf32> to vector<1x256xf32>
    %68 = vector.broadcast %67 : vector<1x256xf32> to vector<4x256xf32>
    %69 = arith.mulf %65, %68 : vector<4x256xf32>
    %c7_47 = arith.constant 7 : index
    %c0_48 = arith.constant 0 : index
    %c0_49 = arith.constant 0 : index
    %70 = vector.load %arg2[%c7_47, %c0_48, %c0_49] : memref<9x4x4xf32, #tpu.memory_space<vmem>>, vector<1x4x4xf32>
    %71 = vector.shape_cast %70 : vector<1x4x4xf32> to vector<4x4xf32>
    %cst_50 = arith.constant dense<0.000000e+00> : vector<4x256xf32>
    %72 = tpu.matmul %71, %69, %cst_50 {dimension_numbers = #tpu.dot_dimension_numbers<[1], [0], [0], [1], [0, 0, 1, 1], [], []>} : vector<4x4xf32>, vector<4x256xf32>, vector<4x256xf32> -> vector<4x256xf32>
    %73 = arith.addf %64, %72 : vector<4x256xf32>
    %c239_i32 = arith.constant 239 : i32
    %74 = tpu.dynamic_rotate %1 by %c239_i32 dim 1 : vector<4x256xf32>, i32 -> vector<4x256xf32>
    %c8 = arith.constant 8 : index
    %c0_51 = arith.constant 0 : index
    %c0_52 = arith.constant 0 : index
    %75 = vector.load %arg3[%c8, %c0_51, %c0_52] : memref<9x1x256xf32, #tpu.memory_space<vmem>>, vector<1x1x256xf32>
    %76 = vector.shape_cast %75 : vector<1x1x256xf32> to vector<1x256xf32>
    %77 = vector.broadcast %76 : vector<1x256xf32> to vector<4x256xf32>
    %78 = arith.mulf %74, %77 : vector<4x256xf32>
    %c8_53 = arith.constant 8 : index
    %c0_54 = arith.constant 0 : index
    %c0_55 = arith.constant 0 : index
    %79 = vector.load %arg2[%c8_53, %c0_54, %c0_55] : memref<9x4x4xf32, #tpu.memory_space<vmem>>, vector<1x4x4xf32>
    %80 = vector.shape_cast %79 : vector<1x4x4xf32> to vector<4x4xf32>
    %cst_56 = arith.constant dense<0.000000e+00> : vector<4x256xf32>
    %81 = tpu.matmul %80, %78, %cst_56 {dimension_numbers = #tpu.dot_dimension_numbers<[1], [0], [0], [1], [0, 0, 1, 1], [], []>} : vector<4x4xf32>, vector<4x256xf32>, vector<4x256xf32> -> vector<4x256xf32>
    %82 = arith.addf %73, %81 : vector<4x256xf32>
    %c0_57 = arith.constant 0 : index
    %c0_58 = arith.constant 0 : index
    %c0_59 = arith.constant 0 : index
    %83 = vector.load %arg4[%c0_57, %c0_58, %c0_59] : memref<1x4x256xf32, #tpu.memory_space<vmem>>, vector<1x4x256xf32>
    %84 = vector.shape_cast %83 : vector<1x4x256xf32> to vector<4x256xf32>
    %85 = vector.shape_cast %82 : vector<4x256xf32> to vector<1x4x256xf32>
    tpu.vector_store %arg4[%c0_57, %c0_58, %c0_59], %85 {strides = array<i32>} : memref<1x4x256xf32, #tpu.memory_space<vmem>>, vector<1x4x256xf32>,
    return
  }
  func.func @transform_0(%arg0: i32) -> (i32, i32, i32) {
    %c0_i32 = arith.constant 0 : i32
    %c0_i32_0 = arith.constant 0 : i32
    %c0_i32_1 = arith.constant 0 : i32
    return %arg0, %c0_i32, %c0_i32_0 : i32, i32, i32
  }
  func.func @transform_1(%arg0: i32) -> (i32, i32, i32) {
    %c0_i32 = arith.constant 0 : i32
    %c0_i32_0 = arith.constant 0 : i32
    %c0_i32_1 = arith.constant 0 : i32
    %c0_i32_2 = arith.constant 0 : i32
    return %c0_i32, %c0_i32_0, %c0_i32_1 : i32, i32, i32
  }
  func.func @transform_2(%arg0: i32) -> (i32, i32, i32) {
    %c0_i32 = arith.constant 0 : i32
    %c0_i32_0 = arith.constant 0 : i32
    %c0_i32_1 = arith.constant 0 : i32
    %c0_i32_2 = arith.constant 0 : i32
    return %c0_i32, %c0_i32_0, %c0_i32_1 : i32, i32, i32
  }
  func.func @transform_3(%arg0: i32) -> (i32, i32, i32) {
    %c0_i32 = arith.constant 0 : i32
    %c0_i32_0 = arith.constant 0 : i32
    %c0_i32_1 = arith.constant 0 : i32
    return %arg0, %c0_i32, %c0_i32_0 : i32, i32, i32
  }
}

</mosaic_0001>

<llo_original>
// kernel: tpu_custom_call.1
$region0: #{tpu_custom_call.1}
  #allocation0 [shape = 'u32[]', space=smem, size = 0x4, offset = 0x4, fixed_abs, tag = 'smem constant byte address 0x4 - core index']
  #allocation1 [shape = 'u32[72,128]{1,0:T(1,128)}', space=vmem, size = 0x9000, scoped, tag = 'internal scratch']
  %s0 = inlined_call_operand.vmem [shape: f32[2,4,256], index: 0, kind: input, shape index: {}]
  %s1 = inlined_call_operand.vmem [shape: f32[9,4,4], index: 1, kind: input, shape index: {}]
  %s2 = inlined_call_operand.vmem [shape: f32[9,1,256], index: 2, kind: input, shape index: {}]
  %s3 = inlined_call_operand.hbm [shape: f32[2,4,256], index: 3, kind: output, shape index: {}]
  %s4 = sld [smem:[#allocation0]]
  $region45: #{tpu_custom_call.1} parent=0
    _
  %s6 = ssub.s32 1, %s4
  %s7 = scalar_select 0, %s6, %s4
  $region1: #{tpu_custom_call.1} parent=0
    #allocation2 [shape = 'u8[8192]{0}', space=vmem, size = 0x2000, scoped, tag = 'output window, operand 0']
    #allocation3 [shape = 's32[2]{0}', space=sflag, size = 0x8, scoped, tag = 'scoped memory for tpu_custom_call.1']
    %8 = vsyncpa [#allocation3], 0
    %s9 = scalar_lea.sflag [#allocation3], 1
    %10 = vsyncpa %s9, 0
    loop: start=0, step=1, limit=4
    $region2: #{tpu_custom_call.1} parent=1 // loop_pre_header
      _
    $region3: #{tpu_custom_call.1} parent=1 // loop_header
      %s12 = sphi 0, %s16
      %p13 = scmp.ge.s32.totalorder %s12, 4
      %s22 = sphi 0, %s24
      %s25 = sphi 0, %s22
      %s26 = sphi 0, %s25
      %s42 = sphi 0, %s26
      %s46 = sphi 0, %s46
      %s48 = sphi 0, %s46
      %s49 = sphi 0, %s48
      %s63 = sphi 0, %s49
      %s67 = sphi 0, %s67
      %s69 = sphi 0, %s67
      %s70 = sphi 0, %s69
      %s84 = sphi 0, %s70
      %s90 = sphi 0, %s92
      %s93 = sphi 0, %s90
      %s94 = sphi 0, %s93
      %s110 = sphi 0, %s94
    $region4: #{tpu_custom_call.1} parent=1 // loop_header_branch
      %15 = sbr.rel (%p13) target = $region8
    $region5: #{tpu_custom_call.1} parent=1 // loop_body
      %s17 = ssub.s32 %s12, 1
      %s18 = ssub.s32 %s12, 2
      %s19 = sadd.s32 %s12, 1
      %s20 = ssub.s32 %s12, %s19
      %p21 = scmp.eq.s32.totalorder %s20, 0
      %s23 = sadd.s32 %s22, 1
      %s24 = scalar_select %p21, %s22, %s23
      %p27 = pneg %p21
      %p28 = scmp.eq.s32.totalorder %s12, 1
      %p29 = por %p27, %p28
      %p30 = scmp.ne.s32.totalorder %s22, %s25
      %p31 = scmp.eq.s32.totalorder %s12, 0
      %p32 = por %p30, %p31
      %p33 = scmp.ne.s32.totalorder %s22, %s25
      %p34 = scmp.eq.s32.totalorder %s17, 1
      %p35 = por %p33, %p34
      %p36 = scmp.ne.s32.totalorder %s25, %s26
      %p37 = scmp.eq.s32.totalorder %s17, 0
      %p38 = por %p36, %p37
      %p39 = scmp.ne.s32.totalorder %s25, %s26
      %p40 = scmp.eq.s32.totalorder %s18, 1
      %p41 = por %p39, %p40
      %p43 = scmp.ne.s32.totalorder %s26, %s42
      %p44 = scmp.eq.s32.totalorder %s18, 0
      %p45 = por %p43, %p44
      %s47 = sadd.s32 %s46, 1
      %p50 = scmp.eq.s32.totalorder %s12, 1
      %p51 = scmp.ne.s32.totalorder %s46, %s48
      %p52 = scmp.eq.s32.totalorder %s12, 0
      %p53 = por %p51, %p52
      %p54 = scmp.ne.s32.totalorder %s46, %s48
      %p55 = scmp.eq.s32.totalorder %s17, 1
      %p56 = por %p54, %p55
      %p57 = scmp.ne.s32.totalorder %s48, %s49
      %p58 = scmp.eq.s32.totalorder %s17, 0
      %p59 = por %p57, %p58
      %p60 = scmp.ne.s32.totalorder %s48, %s49
      %p61 = scmp.eq.s32.totalorder %s18, 1
      %p62 = por %p60, %p61
      %p64 = scmp.ne.s32.totalorder %s49, %s63
      %p65 = scmp.eq.s32.totalorder %s18, 0
      %p66 = por %p64, %p65
      %s68 = sadd.s32 %s67, 1
      %p71 = scmp.eq.s32.totalorder %s12, 1
      %p72 = scmp.ne.s32.totalorder %s67, %s69
      %p73 = scmp.eq.s32.totalorder %s12, 0
      %p74 = por %p72, %p73
      %p75 = scmp.ne.s32.totalorder %s67, %s69
      %p76 = scmp.eq.s32.totalorder %s17, 1
      %p77 = por %p75, %p76
      %p78 = scmp.ne.s32.totalorder %s69, %s70
      %p79 = scmp.eq.s32.totalorder %s17, 0
      %p80 = por %p78, %p79
      %p81 = scmp.ne.s32.totalorder %s69, %s70
      %p82 = scmp.eq.s32.totalorder %s18, 1
      %p83 = por %p81, %p82
      %p85 = scmp.ne.s32.totalorder %s70, %s84
      %p86 = scmp.eq.s32.totalorder %s18, 0
      %p87 = por %p85, %p86
      %s88 = ssub.s32 %s12, %s19
      %p89 = scmp.eq.s32.totalorder %s88, 0
      %s91 = sadd.s32 %s90, 1
      %s92 = scalar_select %p89, %s90, %s91
      %p95 = pneg %p89
      %p96 = scmp.eq.s32.totalorder %s12, 1
      %p97 = por %p95, %p96
      %p98 = scmp.ne.s32.totalorder %s90, %s93
      %p99 = scmp.eq.s32.totalorder %s12, 0
      %p100 = por %p98, %p99
      %p101 = scmp.ne.s32.totalorder %s90, %s93
      %p102 = scmp.eq.s32.totalorder %s17, 1
      %p103 = por %p101, %p102
      %p104 = scmp.ne.s32.totalorder %s93, %s94
      %p105 = scmp.eq.s32.totalorder %s17, 0
      %p106 = por %p104, %p105
      %p107 = scmp.ne.s32.totalorder %s93, %s94
      %p108 = scmp.eq.s32.totalorder %s18, 1
      %p109 = por %p107, %p108
      %p111 = scmp.ne.s32.totalorder %s94, %s110
      %p112 = scmp.eq.s32.totalorder %s18, 0
      %p113 = por %p111, %p112
      %p114 = scmp.le.s32.totalorder 1, %s12
      %p115 = scmp.lt.s32.totalorder %s12, 3
      %p116 = pnand %p114, %p115
      %p117 = pneg %p116
      // Predicated region
      $region9: #{tpu_custom_call.1} parent=5 // pred_check
        _
      $region10: #{tpu_custom_call.1} parent=5 // pred_check_branch
        %119 = sbr.rel (%p116) target = $region12
      $region11: #{tpu_custom_call.1} parent=5 // pred_region
        %s120 = ssub.s32 %s12, 1
        // Predicated region
        $region13: #{tpu_custom_call.1} parent=11 // pred_check
          %p121 = pneg %p59
        $region14: #{tpu_custom_call.1} parent=11 // pred_check_branch
          %123 = sbr.rel (%p121) target = $region16
        $region15: #{tpu_custom_call.1} parent=11 // pred_region
          _
        $region16: #{tpu_custom_call.1} parent=11 // pred_fallthru
          _
        // Predicated region
        $region17: #{tpu_custom_call.1} parent=11 // pred_check
          %p124 = pneg %p80
        $region18: #{tpu_custom_call.1} parent=11 // pred_check_branch
          %126 = sbr.rel (%p124) target = $region20
        $region19: #{tpu_custom_call.1} parent=11 // pred_region
          _
        $region20: #{tpu_custom_call.1} parent=11 // pred_fallthru
          _
      $region12: #{tpu_custom_call.1} parent=5 // pred_fallthru
        _
      %p127 = scmp.lt.s32.totalorder %s12, 2
      // Predicated region
      $region21: #{tpu_custom_call.1} parent=5 // pred_check
        %p128 = pneg %p127
      $region22: #{tpu_custom_call.1} parent=5 // pred_check_branch
        %130 = sbr.rel (%p128) target = $region24
      $region23: #{tpu_custom_call.1} parent=5 // pred_region
        // Predicated region
        $region25: #{tpu_custom_call.1} parent=23 // pred_check
          %p131 = pneg %p32
        $region26: #{tpu_custom_call.1} parent=23 // pred_check_branch
          %133 = sbr.rel (%p131) target = $region28
        $region27: #{tpu_custom_call.1} parent=23 // pred_region
          %p134 = scmp.lt.s32.totalorder %s12, 1
          %s135 = scalar_select %p134, %s12, 1
          %s136 = smul.addr %s135, 2
          %s137 = smul.addr %s136, 4
          %s138 = scalar_lea.vmem %s0, %s137
        $region28: #{tpu_custom_call.1} parent=23 // pred_fallthru
          _
      $region24: #{tpu_custom_call.1} parent=5 // pred_fallthru
        _
      %p139 = scmp.le.s32.totalorder 1, %s12
      %p140 = scmp.lt.s32.totalorder %s12, 3
      %p141 = pnand %p139, %p140
      %p142 = pneg %p141
      // Predicated region
      $region29: #{tpu_custom_call.1} parent=5 // pred_check
        _
      $region30: #{tpu_custom_call.1} parent=5 // pred_check_branch
        %144 = sbr.rel (%p141) target = $region32
      $region31: #{tpu_custom_call.1} parent=5 // pred_region
        %s145 = ssub.s32 %s12, 1
        %p146 = scmp.lt.s32.totalorder %s17, 1
        %s147 = scalar_select %p146, %s17, 1
        %s148 = smul.addr %s147, 2
        %s149 = smul.addr %s148, 4
        %s150 = scalar_lea.vmem %s0, %s149
        %p151 = pneg %p38
        %p152 = pneg %p35
        %p153 = pneg %p59
        %p154 = pneg %p56
        %p155 = pneg %p80
        %p156 = pneg %p77
        %p157 = pneg %p106
        %p158 = pneg %p103
        %s159 = sand.u32 %s93, 1
        %s160 = scalar_lea.sflag [#allocation3], %s159
        %s161 = sand.u32 %s93, 1
        %s162 = smul.addr %s161, 8
        %s163 = scalar_lea.vmem [#allocation2], %s162
        %p164 = scmp.lt.s32.totalorder %s17, 1
        %s165 = scalar_select %p164, %s17, 1
        %s166 = smul.addr %s165, 2
        %s167 = smul.addr %s166, 4
        %s168 = scalar_lea.vmem %s0, %s167
        %v169 = vld [vmem:[%s168] sm:$0xff]
        %171 = vst [vmem:[#allocation1] ss:$2 sm:$0xff] %v169
        %v172 = vld.sshfl [vmem:[#allocation1] sm:$0xff pattern:$0x75316420]
        %v173 = vld.sshfl [vmem:[#allocation1 + $0x8] sm:$0xff pattern:$0x75316420]
        %176 = vrot.lane.b32.xlu0 %v172, 17
        %v177 = vpop.permute.xlu0 %176
        %178 = vrot.lane.b32.xlu0 %v173, 17
        %v179 = vpop.permute.xlu0 %178
        %v180 = vlaneseq
        %v181 = vand.u32 %v180, 127
        %vm182 = vcmp.lt.s32.totalorder %v181, 17
        %v183 = vsel %vm182, %v177, %v179
        %v184 = vsel %vm182, %v179, %v177
        %v185 = vld [vmem:[%s2] sm:$0x3]
        %v187 = vperm.slane %v185, 0
        %v188 = vperm.slane %v185, 1
        %v191 = vmul.f32 %v184, %v187
        %v192 = vmul.f32 %v183, %v188
        %v193 = vld [vmem:[%s1] sm:$0xf]
        %194 = vst [vmem:[#allocation1] ss:$2 sm:$0xff] %v169
        %v195 = vld.sshfl [vmem:[#allocation1] sm:$0xff pattern:$0x75316420]
        %v196 = vld.sshfl [vmem:[#allocation1 + $0x8] sm:$0xff pattern:$0x75316420]
        %199 = vrot.lane.b32.xlu0 %v195, 16
        %v200 = vpop.permute.xlu0 %199
        %201 = vrot.lane.b32.xlu0 %v196, 16
        %v202 = vpop.permute.xlu0 %201
        %vm203 = vcmp.lt.s32.totalorder %v181, 16
        %v204 = vsel %vm203, %v200, %v202
        %v205 = vsel %vm203, %v202, %v200
        %s206 = scalar_lea.vmem %s2, 2
        %v207 = vld [vmem:[%s206] sm:$0x3]
        %v209 = vperm.slane %v207, 0
        %v210 = vperm.slane %v207, 1
        %v213 = vmul.f32 %v205, %v209
        %v214 = vmul.f32 %v204, %v210
        %s215 = scalar_lea.vmem %s1, 4
        %v216 = vld [vmem:[%s215] sm:$0xf]
        %vm217 = vcmask 31744
        %v219 = vsel %vm217, %v216, 0
        %vm221 = vcmask 1043456
        %v223 = vsel %vm221, %v213, 0
        %v226 = vsel %vm221, %v214, 0
        %228 = vmatpush.msra.mxu0 0.0
        %229 = vmatpush.msra.mxu0 0.0
        %230 = vmatpush.msra.mxu0 0.0
        %231 = vmatpush.msra.mxu0 0.0
        %232 = vmatpush.msra.mxu0 0.0
        %233 = vmatpush.msra.mxu0 0.0
        %234 = vmatpush.msra.mxu0 0.0
        %235 = vmatpush.msra.mxu0 0.0
        %236 = vmatpush.msra.mxu0 0.0
        %237 = vmatpush.msra.mxu0 0.0
        %238 = vmatpush.msra.mxu0 0.0
        %239 = vmatpush.msra.mxu0 0.0
        %240 = vmatpush.msra.mxu0 0.0
        %241 = vmatpush.msra.mxu0 0.0
        %242 = vmatpush.msra.mxu0 0.0
        %243 = vmatpush.msra.mxu0 %v223
        %244 = vmatmul.f32.gmra.mxu0 %v219
        %v245 = vpop.f32.mrf.mxu0
        %v246 = vadd.f32 0.0, %v245
        %247 = vdwg.mxu0
        %248 = vmatpush.msra.mxu0 0.0
        %249 = vmatpush.msra.mxu0 0.0
        %250 = vmatpush.msra.mxu0 0.0
        %251 = vmatpush.msra.mxu0 0.0
        %252 = vmatpush.msra.mxu0 0.0
        %253 = vmatpush.msra.mxu0 0.0
        %254 = vmatpush.msra.mxu0 0.0
        %255 = vmatpush.msra.mxu0 0.0
        %256 = vmatpush.msra.mxu0 0.0
        %257 = vmatpush.msra.mxu0 0.0
        %258 = vmatpush.msra.mxu0 0.0
        %259 = vmatpush.msra.mxu0 0.0
        %260 = vmatpush.msra.mxu0 0.0
        %261 = vmatpush.msra.mxu0 0.0
        %262 = vmatpush.msra.mxu0 0.0
        %263 = vmatpush.msra.mxu0 %v226
        %264 = vmatmul.f32.gmra.mxu0 %v219
        %v265 = vpop.f32.mrf.mxu0
        %v266 = vadd.f32 0.0, %v265
        %267 = vdwg.mxu0
        %v269 = vsel %vm217, %v193, 0
        %v272 = vsel %vm221, %v191, 0
        %v275 = vsel %vm221, %v192, 0
        %277 = vmatpush.msra.mxu0 0.0
        %278 = vmatpush.msra.mxu0 0.0
        %279 = vmatpush.msra.mxu0 0.0
        %280 = vmatpush.msra.mxu0 0.0
        %281 = vmatpush.msra.mxu0 0.0
        %282 = vmatpush.msra.mxu0 0.0
        %283 = vmatpush.msra.mxu0 0.0
        %284 = vmatpush.msra.mxu0 0.0
        %285 = vmatpush.msra.mxu0 0.0
        %286 = vmatpush.msra.mxu0 0.0
        %287 = vmatpush.msra.mxu0 0.0
        %288 = vmatpush.msra.mxu0 0.0
        %289 = vmatpush.msra.mxu0 0.0
        %290 = vmatpush.msra.mxu0 0.0
        %291 = vmatpush.msra.mxu0 0.0
        %292 = vmatpush.msra.mxu0 %v272
        %293 = vmatmul.f32.gmra.mxu0 %v269
        %v294 = vpop.f32.mrf.mxu0
        %v295 = vadd.f32 %v246, %v294
        %296 = vdwg.mxu0
        %297 = vmatpush.msra.mxu0 0.0
        %298 = vmatpush.msra.mxu0 0.0
        %299 = vmatpush.msra.mxu0 0.0
        %300 = vmatpush.msra.mxu0 0.0
        %301 = vmatpush.msra.mxu0 0.0
        %302 = vmatpush.msra.mxu0 0.0
        %303 = vmatpush.msra.mxu0 0.0
        %304 = vmatpush.msra.mxu0 0.0
        %305 = vmatpush.msra.mxu0 0.0
        %306 = vmatpush.msra.mxu0 0.0
        %307 = vmatpush.msra.mxu0 0.0
        %308 = vmatpush.msra.mxu0 0.0
        %309 = vmatpush.msra.mxu0 0.0
        %310 = vmatpush.msra.mxu0 0.0
        %311 = vmatpush.msra.mxu0 0.0
        %312 = vmatpush.msra.mxu0 %v275
        %313 = vmatmul.f32.gmra.mxu0 %v269
        %v314 = vpop.f32.mrf.mxu0
        %v315 = vadd.f32 %v266, %v314
        %316 = vdwg.mxu0
        %317 = vst [vmem:[#allocation1] ss:$2 sm:$0xff] %v169
        %v318 = vld.sshfl [vmem:[#allocation1] sm:$0xff pattern:$0x75316420]
        %v319 = vld.sshfl [vmem:[#allocation1 + $0x8] sm:$0xff pattern:$0x75316420]
        %322 = vrot.lane.b32.xlu0 %v318, 15
        %v323 = vpop.permute.xlu0 %322
        %324 = vrot.lane.b32.xlu0 %v319, 15
        %v325 = vpop.permute.xlu0 %324
        %vm326 = vcmp.lt.s32.totalorder %v181, 15
        %v327 = vsel %vm326, %v323, %v325
        %v328 = vsel %vm326, %v325, %v323
        %s329 = scalar_lea.vmem %s2, 4
        %v330 = vld [vmem:[%s329] sm:$0x3]
        %v332 = vperm.slane %v330, 0
        %v333 = vperm.slane %v330, 1
        %v336 = vmul.f32 %v328, %v332
        %v337 = vmul.f32 %v327, %v333
        %s338 = scalar_lea.vmem %s1, 8
        %v339 = vld [vmem:[%s338] sm:$0xf]
        %v341 = vsel %vm217, %v339, 0
        %v344 = vsel %vm221, %v336, 0
        %v347 = vsel %vm221, %v337, 0
        %349 = vmatpush.msra.mxu0 0.0
        %350 = vmatpush.msra.mxu0 0.0
        %351 = vmatpush.msra.mxu0 0.0
        %352 = vmatpush.msra.mxu0 0.0
        %353 = vmatpush.msra.mxu0 0.0
        %354 = vmatpush.msra.mxu0 0.0
        %355 = vmatpush.msra.mxu0 0.0
        %356 = vmatpush.msra.mxu0 0.0
        %357 = vmatpush.msra.mxu0 0.0
        %358 = vmatpush.msra.mxu0 0.0
        %359 = vmatpush.msra.mxu0 0.0
        %360 = vmatpush.msra.mxu0 0.0
        %361 = vmatpush.msra.mxu0 0.0
        %362 = vmatpush.msra.mxu0 0.0
        %363 = vmatpush.msra.mxu0 0.0
        %364 = vmatpush.msra.mxu0 %v344
        %365 = vmatmul.f32.gmra.mxu0 %v341
        %v366 = vpop.f32.mrf.mxu0
        %v367 = vadd.f32 0.0, %v366
        %368 = vdwg.mxu0
        %369 = vmatpush.msra.mxu0 0.0
        %370 = vmatpush.msra.mxu0 0.0
        %371 = vmatpush.msra.mxu0 0.0
        %372 = vmatpush.msra.mxu0 0.0
        %373 = vmatpush.msra.mxu0 0.0
        %374 = vmatpush.msra.mxu0 0.0
        %375 = vmatpush.msra.mxu0 0.0
        %376 = vmatpush.msra.mxu0 0.0
        %377 = vmatpush.msra.mxu0 0.0
        %378 = vmatpush.msra.mxu0 0.0
        %379 = vmatpush.msra.mxu0 0.0
        %380 = vmatpush.msra.mxu0 0.0
        %381 = vmatpush.msra.mxu0 0.0
        %382 = vmatpush.msra.mxu0 0.0
        %383 = vmatpush.msra.mxu0 0.0
        %384 = vmatpush.msra.mxu0 %v347
        %385 = vmatmul.f32.gmra.mxu0 %v341
        %v386 = vpop.f32.mrf.mxu0
        %v387 = vadd.f32 0.0, %v386
        %388 = vdwg.mxu0
        %v389 = vadd.f32 %v295, %v367
        %v390 = vadd.f32 %v315, %v387
        %391 = vst [vmem:[#allocation1] ss:$2 sm:$0xff] %v169
        %v392 = vld.sshfl [vmem:[#allocation1] sm:$0xff pattern:$0x75316420]
        %v393 = vld.sshfl [vmem:[#allocation1 + $0x8] sm:$0xff pattern:$0x75316420]
        %396 = vrot.lane.b32.xlu0 %v392, 1
        %v397 = vpop.permute.xlu0 %396
        %398 = vrot.lane.b32.xlu0 %v393, 1
        %v399 = vpop.permute.xlu0 %398
        %vm400 = vcmp.lt.s32.totalorder %v181, 1
        %v401 = vsel %vm400, %v397, %v399
        %v402 = vsel %vm400, %v399, %v397
        %s403 = scalar_lea.vmem %s2, 6
        %v404 = vld [vmem:[%s403] sm:$0x3]
        %v406 = vperm.slane %v404, 0
        %v407 = vperm.slane %v404, 1
        %v410 = vmul.f32 %v402, %v406
        %v411 = vmul.f32 %v401, %v407
        %s412 = scalar_lea.vmem %s1, 12
        %v413 = vld [vmem:[%s412] sm:$0xf]
        %v415 = vsel %vm217, %v413, 0
        %v418 = vsel %vm221, %v410, 0
        %v421 = vsel %vm221, %v411, 0
        %423 = vmatpush.msra.mxu0 0.0
        %424 = vmatpush.msra.mxu0 0.0
        %425 = vmatpush.msra.mxu0 0.0
        %426 = vmatpush.msra.mxu0 0.0
        %427 = vmatpush.msra.mxu0 0.0
        %428 = vmatpush.msra.mxu0 0.0
        %429 = vmatpush.msra.mxu0 0.0
        %430 = vmatpush.msra.mxu0 0.0
        %431 = vmatpush.msra.mxu0 0.0
        %432 = vmatpush.msra.mxu0 0.0
        %433 = vmatpush.msra.mxu0 0.0
        %434 = vmatpush.msra.mxu0 0.0
        %435 = vmatpush.msra.mxu0 0.0
        %436 = vmatpush.msra.mxu0 0.0
        %437 = vmatpush.msra.mxu0 0.0
        %438 = vmatpush.msra.mxu0 %v418
        %439 = vmatmul.f32.gmra.mxu0 %v415
        %v440 = vpop.f32.mrf.mxu0
        %v441 = vadd.f32 0.0, %v440
        %442 = vdwg.mxu0
        %443 = vmatpush.msra.mxu0 0.0
        %444 = vmatpush.msra.mxu0 0.0
        %445 = vmatpush.msra.mxu0 0.0
        %446 = vmatpush.msra.mxu0 0.0
        %447 = vmatpush.msra.mxu0 0.0
        %448 = vmatpush.msra.mxu0 0.0
        %449 = vmatpush.msra.mxu0 0.0
        %450 = vmatpush.msra.mxu0 0.0
        %451 = vmatpush.msra.mxu0 0.0
        %452 = vmatpush.msra.mxu0 0.0
        %453 = vmatpush.msra.mxu0 0.0
        %454 = vmatpush.msra.mxu0 0.0
        %455 = vmatpush.msra.mxu0 0.0
        %456 = vmatpush.msra.mxu0 0.0
        %457 = vmatpush.msra.mxu0 0.0
        %458 = vmatpush.msra.mxu0 %v421
        %459 = vmatmul.f32.gmra.mxu0 %v415
        %v460 = vpop.f32.mrf.mxu0
        %v461 = vadd.f32 0.0, %v460
        %462 = vdwg.mxu0
        %v463 = vadd.f32 %v389, %v441
        %v464 = vadd.f32 %v390, %v461
        %s465 = scalar_lea.vmem %s2, 8
        %v466 = vld [vmem:[%s465] sm:$0x3]
        %v468 = vperm.slane %v466, 0
        %v469 = vperm.slane %v466, 1
        %v470 = vrot.slane %v469, 4
        %v471 = vsel %vm221, %v468, %v470
        %v473 = vmul.f32 %v169, %v471
        %s474 = scalar_lea.vmem %s1, 16
        %v475 = vld [vmem:[%s474] sm:$0xf]
        %477 = vst [vmem:[#allocation1] ss:$2 sm:$0xff] %v473
        %v478 = vld.sshfl [vmem:[#allocation1] sm:$0xff pattern:$0x75316420]
        %v479 = vld.sshfl [vmem:[#allocation1 + $0x8] sm:$0xff pattern:$0x75316420]
        %v481 = vsel %vm217, %v475, 0
        %v483 = vsel %vm221, %v478, 0
        %v485 = vsel %vm221, %v479, 0
        %487 = vmatpush.msra.mxu0 0.0
        %488 = vmatpush.msra.mxu0 0.0
        %489 = vmatpush.msra.mxu0 0.0
        %490 = vmatpush.msra.mxu0 0.0
        %491 = vmatpush.msra.mxu0 0.0
        %492 = vmatpush.msra.mxu0 0.0
        %493 = vmatpush.msra.mxu0 0.0
        %494 = vmatpush.msra.mxu0 0.0
        %495 = vmatpush.msra.mxu0 0.0
        %496 = vmatpush.msra.mxu0 0.0
        %497 = vmatpush.msra.mxu0 0.0
        %498 = vmatpush.msra.mxu0 0.0
        %499 = vmatpush.msra.mxu0 0.0
        %500 = vmatpush.msra.mxu0 0.0
        %501 = vmatpush.msra.mxu0 0.0
        %502 = vmatpush.msra.mxu0 %v483
        %503 = vmatmul.f32.gmra.mxu0 %v481
        %v504 = vpop.f32.mrf.mxu0
        %v505 = vadd.f32 0.0, %v504
        %506 = vdwg.mxu0
        %507 = vmatpush.msra.mxu0 0.0
        %508 = vmatpush.msra.mxu0 0.0
        %509 = vmatpush.msra.mxu0 0.0
        %510 = vmatpush.msra.mxu0 0.0
        %511 = vmatpush.msra.mxu0 0.0
        %512 = vmatpush.msra.mxu0 0.0
        %513 = vmatpush.msra.mxu0 0.0
        %514 = vmatpush.msra.mxu0 0.0
        %515 = vmatpush.msra.mxu0 0.0
        %516 = vmatpush.msra.mxu0 0.0
        %517 = vmatpush.msra.mxu0 0.0
        %518 = vmatpush.msra.mxu0 0.0
        %519 = vmatpush.msra.mxu0 0.0
        %520 = vmatpush.msra.mxu0 0.0
        %521 = vmatpush.msra.mxu0 0.0
        %522 = vmatpush.msra.mxu0 %v485
        %523 = vmatmul.f32.gmra.mxu0 %v481
        %v524 = vpop.f32.mrf.mxu0
        %v525 = vadd.f32 0.0, %v524
        %526 = vdwg.mxu0
        %v527 = vadd.f32 %v463, %v505
        %v528 = vadd.f32 %v464, %v525
        %529 = vst [vmem:[#allocation1] ss:$2 sm:$0xff] %v169
        %v530 = vld.sshfl [vmem:[#allocation1] sm:$0xff pattern:$0x75316420]
        %v531 = vld.sshfl [vmem:[#allocation1 + $0x8] sm:$0xff pattern:$0x75316420]
        %534 = vrot.lane.b32.xlu0 %v530, 127
        %v535 = vpop.permute.xlu0 %534
        %536 = vrot.lane.b32.xlu0 %v531, 127
        %v537 = vpop.permute.xlu0 %536
        %vm538 = vcmp.lt.s32.totalorder %v181, 127
        %v539 = vsel %vm538, %v535, %v537
        %v540 = vsel %vm538, %v537, %v535
        %s541 = scalar_lea.vmem %s2, 10
        %v542 = vld [vmem:[%s541] sm:$0x3]
        %v544 = vperm.slane %v542, 0
        %v545 = vperm.slane %v542, 1
        %v548 = vmul.f32 %v539, %v544
        %v549 = vmul.f32 %v540, %v545
        %s550 = scalar_lea.vmem %s1, 20
        %v551 = vld [vmem:[%s550] sm:$0xf]
        %v553 = vsel %vm217, %v551, 0
        %v556 = vsel %vm221, %v548, 0
        %v559 = vsel %vm221, %v549, 0
        %561 = vmatpush.msra.mxu0 0.0
        %562 = vmatpush.msra.mxu0 0.0
        %563 = vmatpush.msra.mxu0 0.0
        %564 = vmatpush.msra.mxu0 0.0
        %565 = vmatpush.msra.mxu0 0.0
        %566 = vmatpush.msra.mxu0 0.0
        %567 = vmatpush.msra.mxu0 0.0
        %568 = vmatpush.msra.mxu0 0.0
        %569 = vmatpush.msra.mxu0 0.0
        %570 = vmatpush.msra.mxu0 0.0
        %571 = vmatpush.msra.mxu0 0.0
        %572 = vmatpush.msra.mxu0 0.0
        %573 = vmatpush.msra.mxu0 0.0
        %574 = vmatpush.msra.mxu0 0.0
        %575 = vmatpush.msra.mxu0 0.0
        %576 = vmatpush.msra.mxu0 %v556
        %577 = vmatmul.f32.gmra.mxu0 %v553
        %v578 = vpop.f32.mrf.mxu0
        %v579 = vadd.f32 0.0, %v578
        %580 = vdwg.mxu0
        %581 = vmatpush.msra.mxu0 0.0
        %582 = vmatpush.msra.mxu0 0.0
        %583 = vmatpush.msra.mxu0 0.0
        %584 = vmatpush.msra.mxu0 0.0
        %585 = vmatpush.msra.mxu0 0.0
        %586 = vmatpush.msra.mxu0 0.0
        %587 = vmatpush.msra.mxu0 0.0
        %588 = vmatpush.msra.mxu0 0.0
        %589 = vmatpush.msra.mxu0 0.0
        %590 = vmatpush.msra.mxu0 0.0
        %591 = vmatpush.msra.mxu0 0.0
        %592 = vmatpush.msra.mxu0 0.0
        %593 = vmatpush.msra.mxu0 0.0
        %594 = vmatpush.msra.mxu0 0.0
        %595 = vmatpush.msra.mxu0 0.0
        %596 = vmatpush.msra.mxu0 %v559
        %597 = vmatmul.f32.gmra.mxu0 %v553
        %v598 = vpop.f32.mrf.mxu0
        %v599 = vadd.f32 0.0, %v598
        %600 = vdwg.mxu0
        %v601 = vadd.f32 %v527, %v579
        %v602 = vadd.f32 %v528, %v599
        %603 = vst [vmem:[#allocation1] ss:$2 sm:$0xff] %v169
        %v604 = vld.sshfl [vmem:[#allocation1] sm:$0xff pattern:$0x75316420]
        %v605 = vld.sshfl [vmem:[#allocation1 + $0x8] sm:$0xff pattern:$0x75316420]
        %608 = vrot.lane.b32.xlu0 %v604, 113
        %v609 = vpop.permute.xlu0 %608
        %610 = vrot.lane.b32.xlu0 %v605, 113
        %v611 = vpop.permute.xlu0 %610
        %vm612 = vcmp.lt.s32.totalorder %v181, 113
        %v613 = vsel %vm612, %v609, %v611
        %v614 = vsel %vm612, %v611, %v609
        %s615 = scalar_lea.vmem %s2, 12
        %v616 = vld [vmem:[%s615] sm:$0x3]
        %v618 = vperm.slane %v616, 0
        %v619 = vperm.slane %v616, 1
        %v622 = vmul.f32 %v613, %v618
        %v623 = vmul.f32 %v614, %v619
        %s624 = scalar_lea.vmem %s1, 24
        %v625 = vld [vmem:[%s624] sm:$0xf]
        %v627 = vsel %vm217, %v625, 0
        %v630 = vsel %vm221, %v622, 0
        %v633 = vsel %vm221, %v623, 0
        %635 = vmatpush.msra.mxu0 0.0
        %636 = vmatpush.msra.mxu0 0.0
        %637 = vmatpush.msra.mxu0 0.0
        %638 = vmatpush.msra.mxu0 0.0
        %639 = vmatpush.msra.mxu0 0.0
        %640 = vmatpush.msra.mxu0 0.0
        %641 = vmatpush.msra.mxu0 0.0
        %642 = vmatpush.msra.mxu0 0.0
        %643 = vmatpush.msra.mxu0 0.0
        %644 = vmatpush.msra.mxu0 0.0
        %645 = vmatpush.msra.mxu0 0.0
        %646 = vmatpush.msra.mxu0 0.0
        %647 = vmatpush.msra.mxu0 0.0
        %648 = vmatpush.msra.mxu0 0.0
        %649 = vmatpush.msra.mxu0 0.0
        %650 = vmatpush.msra.mxu0 %v630
        %651 = vmatmul.f32.gmra.mxu0 %v627
        %v652 = vpop.f32.mrf.mxu0
        %v653 = vadd.f32 0.0, %v652
        %654 = vdwg.mxu0
        %655 = vmatpush.msra.mxu0 0.0
        %656 = vmatpush.msra.mxu0 0.0
        %657 = vmatpush.msra.mxu0 0.0
        %658 = vmatpush.msra.mxu0 0.0
        %659 = vmatpush.msra.mxu0 0.0
        %660 = vmatpush.msra.mxu0 0.0
        %661 = vmatpush.msra.mxu0 0.0
        %662 = vmatpush.msra.mxu0 0.0
        %663 = vmatpush.msra.mxu0 0.0
        %664 = vmatpush.msra.mxu0 0.0
        %665 = vmatpush.msra.mxu0 0.0
        %666 = vmatpush.msra.mxu0 0.0
        %667 = vmatpush.msra.mxu0 0.0
        %668 = vmatpush.msra.mxu0 0.0
        %669 = vmatpush.msra.mxu0 0.0
        %670 = vmatpush.msra.mxu0 %v633
        %671 = vmatmul.f32.gmra.mxu0 %v627
        %v672 = vpop.f32.mrf.mxu0
        %v673 = vadd.f32 0.0, %v672
        %674 = vdwg.mxu0
        %v675 = vadd.f32 %v601, %v653
        %v676 = vadd.f32 %v602, %v673
        %677 = vst [vmem:[#allocation1] ss:$2 sm:$0xff] %v169
        %v678 = vld.sshfl [vmem:[#allocation1] sm:$0xff pattern:$0x75316420]
        %v679 = vld.sshfl [vmem:[#allocation1 + $0x8] sm:$0xff pattern:$0x75316420]
        %682 = vrot.lane.b32.xlu0 %v678, 112
        %v683 = vpop.permute.xlu0 %682
        %684 = vrot.lane.b32.xlu0 %v679, 112
        %v685 = vpop.permute.xlu0 %684
        %vm686 = vcmp.lt.s32.totalorder %v181, 112
        %v687 = vsel %vm686, %v683, %v685
        %v688 = vsel %vm686, %v685, %v683
        %s689 = scalar_lea.vmem %s2, 14
        %v690 = vld [vmem:[%s689] sm:$0x3]
        %v692 = vperm.slane %v690, 0
        %v693 = vperm.slane %v690, 1
        %v696 = vmul.f32 %v687, %v692
        %v697 = vmul.f32 %v688, %v693
        %s698 = scalar_lea.vmem %s1, 28
        %v699 = vld [vmem:[%s698] sm:$0xf]
        %v701 = vsel %vm217, %v699, 0
        %v704 = vsel %vm221, %v696, 0
        %v707 = vsel %vm221, %v697, 0
        %709 = vmatpush.msra.mxu0 0.0
        %710 = vmatpush.msra.mxu0 0.0
        %711 = vmatpush.msra.mxu0 0.0
        %712 = vmatpush.msra.mxu0 0.0
        %713 = vmatpush.msra.mxu0 0.0
        %714 = vmatpush.msra.mxu0 0.0
        %715 = vmatpush.msra.mxu0 0.0
        %716 = vmatpush.msra.mxu0 0.0
        %717 = vmatpush.msra.mxu0 0.0
        %718 = vmatpush.msra.mxu0 0.0
        %719 = vmatpush.msra.mxu0 0.0
        %720 = vmatpush.msra.mxu0 0.0
        %721 = vmatpush.msra.mxu0 0.0
        %722 = vmatpush.msra.mxu0 0.0
        %723 = vmatpush.msra.mxu0 0.0
        %724 = vmatpush.msra.mxu0 %v704
        %725 = vmatmul.f32.gmra.mxu0 %v701
        %v726 = vpop.f32.mrf.mxu0
        %v727 = vadd.f32 0.0, %v726
        %728 = vdwg.mxu0
        %729 = vmatpush.msra.mxu0 0.0
        %730 = vmatpush.msra.mxu0 0.0
        %731 = vmatpush.msra.mxu0 0.0
        %732 = vmatpush.msra.mxu0 0.0
        %733 = vmatpush.msra.mxu0 0.0
        %734 = vmatpush.msra.mxu0 0.0
        %735 = vmatpush.msra.mxu0 0.0
        %736 = vmatpush.msra.mxu0 0.0
        %737 = vmatpush.msra.mxu0 0.0
        %738 = vmatpush.msra.mxu0 0.0
        %739 = vmatpush.msra.mxu0 0.0
        %740 = vmatpush.msra.mxu0 0.0
        %741 = vmatpush.msra.mxu0 0.0
        %742 = vmatpush.msra.mxu0 0.0
        %743 = vmatpush.msra.mxu0 0.0
        %744 = vmatpush.msra.mxu0 %v707
        %745 = vmatmul.f32.gmra.mxu0 %v701
        %v746 = vpop.f32.mrf.mxu0
        %v747 = vadd.f32 0.0, %v746
        %748 = vdwg.mxu0
        %v749 = vadd.f32 %v675, %v727
        %v750 = vadd.f32 %v676, %v747
        %751 = vst [vmem:[#allocation1] ss:$2 sm:$0xff] %v169
        %v752 = vld.sshfl [vmem:[#allocation1] sm:$0xff pattern:$0x75316420]
        %v753 = vld.sshfl [vmem:[#allocation1 + $0x8] sm:$0xff pattern:$0x75316420]
        %756 = vrot.lane.b32.xlu0 %v752, 111
        %v757 = vpop.permute.xlu0 %756
        %758 = vrot.lane.b32.xlu0 %v753, 111
        %v759 = vpop.permute.xlu0 %758
        %vm760 = vcmp.lt.s32.totalorder %v181, 111
        %v761 = vsel %vm760, %v757, %v759
        %v762 = vsel %vm760, %v759, %v757
        %s763 = scalar_lea.vmem %s2, 16
        %v764 = vld [vmem:[%s763] sm:$0x3]
        %v766 = vperm.slane %v764, 0
        %v767 = vperm.slane %v764, 1
        %v770 = vmul.f32 %v761, %v766
        %v771 = vmul.f32 %v762, %v767
        %s772 = scalar_lea.vmem %s1, 32
        %v773 = vld [vmem:[%s772] sm:$0xf]
        %v775 = vsel %vm217, %v773, 0
        %v778 = vsel %vm221, %v770, 0
        %v781 = vsel %vm221, %v771, 0
        %783 = vmatpush.msra.mxu0 0.0
        %784 = vmatpush.msra.mxu0 0.0
        %785 = vmatpush.msra.mxu0 0.0
        %786 = vmatpush.msra.mxu0 0.0
        %787 = vmatpush.msra.mxu0 0.0
        %788 = vmatpush.msra.mxu0 0.0
        %789 = vmatpush.msra.mxu0 0.0
        %790 = vmatpush.msra.mxu0 0.0
        %791 = vmatpush.msra.mxu0 0.0
        %792 = vmatpush.msra.mxu0 0.0
        %793 = vmatpush.msra.mxu0 0.0
        %794 = vmatpush.msra.mxu0 0.0
        %795 = vmatpush.msra.mxu0 0.0
        %796 = vmatpush.msra.mxu0 0.0
        %797 = vmatpush.msra.mxu0 0.0
        %798 = vmatpush.msra.mxu0 %v778
        %799 = vmatmul.f32.gmra.mxu0 %v775
        %v800 = vpop.f32.mrf.mxu0
        %v801 = vadd.f32 0.0, %v800
        %802 = vdwg.mxu0
        %803 = vmatpush.msra.mxu0 0.0
        %804 = vmatpush.msra.mxu0 0.0
        %805 = vmatpush.msra.mxu0 0.0
        %806 = vmatpush.msra.mxu0 0.0
        %807 = vmatpush.msra.mxu0 0.0
        %808 = vmatpush.msra.mxu0 0.0
        %809 = vmatpush.msra.mxu0 0.0
        %810 = vmatpush.msra.mxu0 0.0
        %811 = vmatpush.msra.mxu0 0.0
        %812 = vmatpush.msra.mxu0 0.0
        %813 = vmatpush.msra.mxu0 0.0
        %814 = vmatpush.msra.mxu0 0.0
        %815 = vmatpush.msra.mxu0 0.0
        %816 = vmatpush.msra.mxu0 0.0
        %817 = vmatpush.msra.mxu0 0.0
        %818 = vmatpush.msra.mxu0 %v781
        %819 = vmatmul.f32.gmra.mxu0 %v775
        %v820 = vpop.f32.mrf.mxu0
        %v821 = vadd.f32 0.0, %v820
        %822 = vdwg.mxu0
        %v823 = vadd.f32 %v749, %v801
        %v824 = vadd.f32 %v750, %v821
        %v827 = vrot.slane %v824, 4
        %v828 = vsel %vm221, %v823, %v827
        %830 = vst [vmem:[%s163] sm:$0xff] %v828
        %s831 = sand.u32 %s93, 1
        %s832 = scalar_lea.sflag [#allocation3], %s831
        %s833 = sand.u32 %s93, 1
        %s834 = smul.addr %s833, 8
        %s835 = scalar_lea.vmem [#allocation2], %s834
        // Predicated region
        $region33: #{tpu_custom_call.1} parent=31 // pred_check
          %p836 = pneg %p103
        $region34: #{tpu_custom_call.1} parent=31 // pred_check_branch
          %838 = sbr.rel (%p836) target = $region36
        $region35: #{tpu_custom_call.1} parent=31 // pred_region
          %840 = vsyncadd %s832, 0
          %s841 = smul.addr %s17, 2
          %s842 = smul.addr %s841, 4
          %s843 = scalar_lea.hbm %s3, %s842
          %s845 = sshll.u32 %s835, 4
          %s846 = int_to_ptr.vmem [resolvable:$true] %s845
          %s847 = sshll.u32 %s843, 4
          %s848 = int_to_ptr.hbm [resolvable:$true] %s847
          %850 = dma.vmem_to_hbm [thread:$0]  %s846, 128, %s848, %s832
        $region36: #{tpu_custom_call.1} parent=31 // pred_fallthru
          _
      $region32: #{tpu_custom_call.1} parent=5 // pred_fallthru
        _
      %p851 = scmp.le.s32.totalorder 2, %s12
      // Predicated region
      $region37: #{tpu_custom_call.1} parent=5 // pred_check
        %p852 = pneg %p851
      $region38: #{tpu_custom_call.1} parent=5 // pred_check_branch
        %854 = sbr.rel (%p852) target = $region40
      $region39: #{tpu_custom_call.1} parent=5 // pred_region
        %s855 = ssub.s32 %s12, 2
        // Predicated region
        $region41: #{tpu_custom_call.1} parent=39 // pred_check
          %p856 = pneg %p109
        $region42: #{tpu_custom_call.1} parent=39 // pred_check_branch
          %858 = sbr.rel (%p856) target = $region44
        $region43: #{tpu_custom_call.1} parent=39 // pred_region
          %s859 = sand.u32 %s94, 1
          %s860 = scalar_lea.sflag [#allocation3], %s859
          %s861 = sand.u32 %s94, 1
          %s862 = smul.addr %s861, 8
          %s863 = scalar_lea.vmem [#allocation2], %s862
          %865 = dma.done %s860, 128
        $region44: #{tpu_custom_call.1} parent=39 // pred_fallthru
          _
      $region40: #{tpu_custom_call.1} parent=5 // pred_fallthru
        _
    $region6: #{tpu_custom_call.1} parent=1 // loop_footer
      %s16 = sadd.s32 1, %s12
    $region7: #{tpu_custom_call.1} parent=1 // loop_footer_branch
      %11 = sbr.rel target = $region3
    $region8: #{tpu_custom_call.1} parent=1 // loop_exit
      _
    %866 = vsyncpa [#allocation3], 1
    %s867 = scalar_lea.sflag [#allocation3], 1
    %868 = vsyncpa %s867, 1

</llo_original>
